<compile_context>
chip_gen: v7x
topology: tpu7x:2x2x1
jax: 0.10.0
libtpu: 0.0.40
codegen_flags: <defaults>
</compile_context>

<pallas_src>
import jax
import jax.numpy as jnp
from jax.experimental import pallas as pl
from jax.experimental.pallas import tpu as pltpu

LANE = 128


def _round_up(n, m):
    return ((n + m - 1) // m) * m


def model_lstm_kernel(x_ref, h0_ref, c0_ref,
                      w1_ref, b1_ref,
                      wg_ref, bg_ref,
                      w2_ref, b2_ref,
                      action_ref, hc_ref):
    LG = h0_ref.shape[-1]          # padded per-gate span (multiple of 128)

    # fc1 + relu.  bf16 operands, f32 accumulation.
    z = jnp.dot(x_ref[...], w1_ref[...],
                preferred_element_type=jnp.float32) + b1_ref[...]
    z = jnp.maximum(z, 0.0)

    # Fused single-step LSTM gate matmul:
    #   gates = [z, h0] @ [[W_ih_pad], [W_hh_pad]] + (b_ih + b_hh)
    # PyTorch gate order [i, f, g, o]; each gate owns a full 128-lane span.
    zh = jnp.concatenate([z.astype(jnp.bfloat16), h0_ref[...]], axis=1)
    gates = jnp.dot(zh, wg_ref[...],
                    preferred_element_type=jnp.float32) + bg_ref[...]

    # Whole-slab activations, then vreg-aligned slices (no cross-lane work).
    sig = jax.nn.sigmoid(gates)
    tnh = jnp.tanh(gates)
    i_g = sig[:, 0 * LG:1 * LG]
    f_g = sig[:, 1 * LG:2 * LG]
    g_g = tnh[:, 2 * LG:3 * LG]
    o_g = sig[:, 3 * LG:4 * LG]

    # Padded lanes stay exactly zero: gate pre-activation there is 0, so
    # f=0.5*c0_pad(=0) + i=0.5*tanh(0)(=0) = 0, and o*tanh(0) = 0.
    c_new = f_g * c0_ref[...] + i_g * g_g
    h_new = o_g * jnp.tanh(c_new)

    # relu on LSTM output, then fc2 (zero-padded columns -> lane-dense out).
    y = jnp.maximum(h_new, 0.0)
    action = jnp.dot(y.astype(jnp.bfloat16), w2_ref[...],
                     preferred_element_type=jnp.float32) + b2_ref[...]

    action_ref[...] = action                                  # (1, AP) dense
    hc_ref[...] = jnp.concatenate([h_new, c_new], axis=0)     # (2, LG) dense


def pack_params(params, state_size, hidden_size, action_size):
    """One-time packing: fuse gate weights, zero-pad to lane multiples,
    cast weight matrices to bf16 (biases stay f32)."""
    S, H, A = state_size, hidden_size, action_size
    SP = _round_up(S, LANE)
    LG = _round_up(H, LANE)
    AP = _round_up(A, LANE)

    w1p = jnp.zeros((SP, LG), jnp.float32).at[:S, :H].set(params["w1"])
    b1p = jnp.zeros((1, LG), jnp.float32).at[:, :H].set(params["b1"])

    wg = jnp.zeros((2 * LG, 4 * LG), jnp.float32)
    bg = jnp.zeros((1, 4 * LG), jnp.float32)
    for k in range(4):                       # gate order [i, f, g, o]
        wg = wg.at[:H, k * LG:k * LG + H].set(
            params["w_ih"][:, k * H:(k + 1) * H])
        wg = wg.at[LG:LG + H, k * LG:k * LG + H].set(
            params["w_hh"][:, k * H:(k + 1) * H])
        bg = bg.at[:, k * LG:k * LG + H].set(
            params["b_ih"][:, k * H:(k + 1) * H]
            + params["b_hh"][:, k * H:(k + 1) * H])

    w2p = jnp.zeros((LG, AP), jnp.float32).at[:H, :A].set(params["w2"])
    b2p = jnp.zeros((1, AP), jnp.float32).at[:, :A].set(params["b2"])

    return {
        "w1": w1p.astype(jnp.bfloat16), "b1": b1p,
        "wg": wg.astype(jnp.bfloat16), "bg": bg,
        "w2": w2p.astype(jnp.bfloat16), "b2": b2p,
        "dims": (S, H, A, SP, LG, AP),
    }


def model_lstm_forward(x, hidden, packed):
    """x: (1, state_size); hidden = (h0, c0) each (1, 1, hidden_size)."""
    S, H, A, SP, LG, AP = packed["dims"]
    h0, c0 = hidden

    # Per-call lane padding (tiny XLA ops outside the kernel).
    x_pad = jnp.zeros((1, SP), jnp.bfloat16).at[:, :S].set(
        x.astype(jnp.bfloat16))
    h0_pad = jnp.zeros((1, LG), jnp.bfloat16).at[:, :H].set(
        h0.reshape(1, H).astype(jnp.bfloat16))
    c0_pad = jnp.zeros((1, LG), jnp.float32).at[:, :H].set(c0.reshape(1, H))

    vmem = pl.BlockSpec(memory_space=pltpu.MemorySpace.VMEM)
    args = (x_pad, h0_pad, c0_pad,
            packed["w1"], packed["b1"],
            packed["wg"], packed["bg"],
            packed["w2"], packed["b2"])

    action_pad, hc = pl.pallas_call(
        model_lstm_kernel,
        out_shape=(
            jax.ShapeDtypeStruct((1, AP), jnp.float32),
            jax.ShapeDtypeStruct((2, LG), jnp.float32),
        ),
        in_specs=[vmem] * len(args),
        out_specs=(vmem, vmem),
    )(*args)

    # Slice padding back off; match PyTorch output shapes:
    # action (1, action_size); hidden_out as (num_layers=1, batch=1, hidden).
    action = action_pad[:, :A]
    h_out = hc[0:1, :H].reshape(1, 1, H)
    c_out = hc[1:2, :H].reshape(1, 1, H)
    return action, (h_out, c_out)


def init_params(key, state_size, hidden_size, action_size):
    """Deterministic synthetic init (uniform(-1, 1) weights like weights_init;
    small uniform biases like PyTorch defaults).  Weights stored transposed
    vs PyTorch, i.e. (in_features, out_features)."""
    ks = jax.random.split(key, 8)
    u = lambda k, shape, a: jax.random.uniform(
        k, shape, jnp.float32, minval=-a, maxval=a)
    return {
        "w1": u(ks[0], (state_size, hidden_size), 1.0),
        "b1": u(ks[1], (1, hidden_size), 1.0 / jnp.sqrt(state_size)),
        "w_ih": u(ks[2], (hidden_size, 4 * hidden_size), 1.0),
        "b_ih": u(ks[3], (1, 4 * hidden_size), 1.0 / jnp.sqrt(hidden_size)),
        "w_hh": u(ks[4], (hidden_size, 4 * hidden_size), 1.0),
        "b_hh": u(ks[5], (1, 4 * hidden_size), 1.0 / jnp.sqrt(hidden_size)),
        "w2": u(ks[6], (hidden_size, action_size), 1.0),
        "b2": u(ks[7], (1, action_size), 1.0 / jnp.sqrt(hidden_size)),
    }


def reference_forward(x, hidden, params):
    """Pure-JAX f32 reference matching the PyTorch forward."""
    h0, c0 = hidden
    H = params["w1"].shape[1]
    h0 = h0.reshape(1, H)
    c0 = c0.reshape(1, H)
    z = jnp.maximum(x @ params["w1"] + params["b1"], 0.0)
    gates = (z @ params["w_ih"] + params["b_ih"]
             + h0 @ params["w_hh"] + params["b_hh"])
    i = jax.nn.sigmoid(gates[:, 0 * H:1 * H])
    f = jax.nn.sigmoid(gates[:, 1 * H:2 * H])
    g = jnp.tanh(gates[:, 2 * H:3 * H])
    o = jax.nn.sigmoid(gates[:, 3 * H:4 * H])
    c = f * c0 + i * g
    h = o * jnp.tanh(c)
    a = jnp.maximum(h, 0.0) @ params["w2"] + params["b2"]
    return a, (h.reshape(1, 1, H), c.reshape(1, 1, H))


if __name__ == "__main__":
    state_size, hidden_size, action_size = 16, 32, 8

    key = jax.random.PRNGKey(0)
    k_params, k_x, k_h, k_c = jax.random.split(key, 4)

    params = init_params(k_params, state_size, hidden_size, action_size)
    packed = pack_params(params, state_size, hidden_size, action_size)

    x = jax.random.normal(k_x, (1, state_size), jnp.float32)
    h0 = jax.random.normal(k_h, (1, 1, hidden_size), jnp.float32)
    c0 = jax.random.normal(k_c, (1, 1, hidden_size), jnp.float32)

    action, (h_n, c_n) = model_lstm_forward(x, (h0, c0), packed)
    jax.block_until_ready((action, h_n, c_n))

    assert action.shape == (1, action_size)
    assert h_n.shape == (1, 1, hidden_size)
    assert c_n.shape == (1, 1, hidden_size)

    # Loose numerical check vs f32 reference (weights are bf16 in the kernel).
    a_ref, (h_ref, c_ref) = reference_forward(x, (h0, c0), params)
    assert bool(jnp.all(jnp.isfinite(action)))
    assert bool(jnp.allclose(action, a_ref, rtol=0.1, atol=0.2))
    assert bool(jnp.allclose(h_n, h_ref, rtol=0.1, atol=0.2))
    assert bool(jnp.allclose(c_n, c_ref, rtol=0.1, atol=0.2))

    print("KERNEL_OK")
</pallas_src>

<mosaic_0001>
module attributes {stable_mosaic.version = 11 : i64} {
  func.func @model_lstm_kernel(%arg0: memref<1x128xbf16, #tpu.memory_space<vmem>>, %arg1: memref<1x128xbf16, #tpu.memory_space<vmem>>, %arg2: memref<1x128xf32, #tpu.memory_space<vmem>>, %arg3: memref<128x128xbf16, #tpu.memory_space<vmem>>, %arg4: memref<1x128xf32, #tpu.memory_space<vmem>>, %arg5: memref<256x512xbf16, #tpu.memory_space<vmem>>, %arg6: memref<1x512xf32, #tpu.memory_space<vmem>>, %arg7: memref<128x128xbf16, #tpu.memory_space<vmem>>, %arg8: memref<1x128xf32, #tpu.memory_space<vmem>>, %arg9: memref<1x128xf32, #tpu.memory_space<vmem>>, %arg10: memref<2x128xf32, #tpu.memory_space<vmem>>) attributes {dimension_semantics = [], scalar_prefetch = 0 : i64, scratch_operands = 0 : i64, tpu.core_type = #tpu.core_type<tc>} {
    %c0 = arith.constant 0 : index
    %c0_0 = arith.constant 0 : index
    %0 = vector.load %arg0[%c0, %c0_0] : memref<1x128xbf16, #tpu.memory_space<vmem>>, vector<1x128xbf16>
    %c0_1 = arith.constant 0 : index
    %c0_2 = arith.constant 0 : index
    %1 = vector.load %arg3[%c0_1, %c0_2] : memref<128x128xbf16, #tpu.memory_space<vmem>>, vector<128x128xbf16>
    %cst = arith.constant dense<0.000000e+00> : vector<1x128xf32>
    %2 = tpu.matmul %0, %1, %cst {dimension_numbers = #tpu.dot_dimension_numbers<[1], [0], [0], [1], [0, 0, 1, 1], [], []>} : vector<1x128xbf16>, vector<128x128xbf16>, vector<1x128xf32> -> vector<1x128xf32>
    %c0_3 = arith.constant 0 : index
    %c0_4 = arith.constant 0 : index
    %3 = vector.load %arg4[%c0_3, %c0_4] : memref<1x128xf32, #tpu.memory_space<vmem>>, vector<1x128xf32>
    %4 = arith.addf %2, %3 : vector<1x128xf32>
    %cst_5 = arith.constant 0.000000e+00 : f32
    %5 = vector.broadcast %cst_5 : f32 to vector<1x128xf32>
    %6 = arith.maximumf %4, %5 : vector<1x128xf32>
    %7 = arith.truncf %6 : vector<1x128xf32> to vector<1x128xbf16>
    %c0_6 = arith.constant 0 : index
    %c0_7 = arith.constant 0 : index
    %8 = vector.load %arg1[%c0_6, %c0_7] : memref<1x128xbf16, #tpu.memory_space<vmem>>, vector<1x128xbf16>
    %9 = tpu.concatenate %7, %8 in 1 : vector<1x128xbf16>, vector<1x128xbf16> -> vector<1x256xbf16>
    %c0_8 = arith.constant 0 : index
    %c0_9 = arith.constant 0 : index
    %10 = vector.load %arg5[%c0_8, %c0_9] : memref<256x512xbf16, #tpu.memory_space<vmem>>, vector<256x512xbf16>
    %cst_10 = arith.constant dense<0.000000e+00> : vector<1x512xf32>
    %11 = tpu.matmul %9, %10, %cst_10 {dimension_numbers = #tpu.dot_dimension_numbers<[1], [0], [0], [1], [0, 0, 1, 1], [], []>} : vector<1x256xbf16>, vector<256x512xbf16>, vector<1x512xf32> -> vector<1x512xf32>
    %c0_11 = arith.constant 0 : index
    %c0_12 = arith.constant 0 : index
    %12 = vector.load %arg6[%c0_11, %c0_12] : memref<1x512xf32, #tpu.memory_space<vmem>>, vector<1x512xf32>
    %13 = arith.addf %11, %12 : vector<1x512xf32>
    %14 = arith.negf %13 : vector<1x512xf32>
    %15 = math.exp %14 : vector<1x512xf32>
    %cst_13 = arith.constant 1.000000e+00 : f32
    %16 = vector.broadcast %cst_13 : f32 to vector<1x512xf32>
    %17 = arith.addf %16, %15 : vector<1x512xf32>
    %18 = arith.divf %16, %17 : vector<1x512xf32>
    %19 = math.tanh %13 : vector<1x512xf32>
    %20 = vector.extract_strided_slice %18 {offsets = [0, 0], sizes = [1, 128], strides = [1, 1]} : vector<1x512xf32> to vector<1x128xf32>
    %21 = vector.extract_strided_slice %18 {offsets = [0, 128], sizes = [1, 128], strides = [1, 1]} : vector<1x512xf32> to vector<1x128xf32>
    %22 = vector.extract_strided_slice %19 {offsets = [0, 256], sizes = [1, 128], strides = [1, 1]} : vector<1x512xf32> to vector<1x128xf32>
    %23 = vector.extract_strided_slice %18 {offsets = [0, 384], sizes = [1, 128], strides = [1, 1]} : vector<1x512xf32> to vector<1x128xf32>
    %c0_14 = arith.constant 0 : index
    %c0_15 = arith.constant 0 : index
    %24 = vector.load %arg2[%c0_14, %c0_15] : memref<1x128xf32, #tpu.memory_space<vmem>>, vector<1x128xf32>
    %25 = arith.mulf %21, %24 : vector<1x128xf32>
    %26 = arith.mulf %20, %22 : vector<1x128xf32>
    %27 = arith.addf %25, %26 : vector<1x128xf32>
    %28 = math.tanh %27 : vector<1x128xf32>
    %29 = arith.mulf %23, %28 : vector<1x128xf32>
    %cst_16 = arith.constant 0.000000e+00 : f32
    %30 = vector.broadcast %cst_16 : f32 to vector<1x128xf32>
    %31 = arith.maximumf %29, %30 : vector<1x128xf32>
    %32 = arith.truncf %31 : vector<1x128xf32> to vector<1x128xbf16>
    %c0_17 = arith.constant 0 : index
    %c0_18 = arith.constant 0 : index
    %33 = vector.load %arg7[%c0_17, %c0_18] : memref<128x128xbf16, #tpu.memory_space<vmem>>, vector<128x128xbf16>
    %cst_19 = arith.constant dense<0.000000e+00> : vector<1x128xf32>
    %34 = tpu.matmul %32, %33, %cst_19 {dimension_numbers = #tpu.dot_dimension_numbers<[1], [0], [0], [1], [0, 0, 1, 1], [], []>} : vector<1x128xbf16>, vector<128x128xbf16>, vector<1x128xf32> -> vector<1x128xf32>
    %c0_20 = arith.constant 0 : index
    %c0_21 = arith.constant 0 : index
    %35 = vector.load %arg8[%c0_20, %c0_21] : memref<1x128xf32, #tpu.memory_space<vmem>>, vector<1x128xf32>
    %36 = arith.addf %34, %35 : vector<1x128xf32>
    %c0_22 = arith.constant 0 : index
    %c0_23 = arith.constant 0 : index
    %37 = vector.load %arg9[%c0_22, %c0_23] : memref<1x128xf32, #tpu.memory_space<vmem>>, vector<1x128xf32>
    tpu.vector_store %arg9[%c0_22, %c0_23], %36 {strides = array<i32>} : memref<1x128xf32, #tpu.memory_space<vmem>>, vector<1x128xf32>,
    %38 = tpu.concatenate %29, %27 in 0 : vector<1x128xf32>, vector<1x128xf32> -> vector<2x128xf32>
    %c0_24 = arith.constant 0 : index
    %c0_25 = arith.constant 0 : index
    %39 = vector.load %arg10[%c0_24, %c0_25] : memref<2x128xf32, #tpu.memory_space<vmem>>, vector<2x128xf32>
    tpu.vector_store %arg10[%c0_24, %c0_25], %38 {strides = array<i32>} : memref<2x128xf32, #tpu.memory_space<vmem>>, vector<2x128xf32>,
    return
  }
}

</mosaic_0001>

<llo_original>
// kernel: tpu_custom_call.1
$region0: #{tpu_custom_call.1}
  #allocation0 [shape = 'u32[]', space=smem, size = 0x4, offset = 0x4, fixed_abs, tag = 'smem constant byte address 0x4 - core index']
  #allocation1 [shape = 'u32[144,128]{1,0:T(1,128)}', space=vmem, size = 0x12000, scoped, tag = 'internal scratch']
  %s0 = inlined_call_operand.hbm [shape: bf16[1,128], index: 0, kind: input, shape index: {}]
  %s1 = inlined_call_operand.vmem [shape: bf16[1,128], index: 1, kind: input, shape index: {}]
  %s2 = inlined_call_operand.vmem [shape: f32[1,128], index: 2, kind: input, shape index: {}]
  %s3 = inlined_call_operand.hbm [shape: bf16[128,128], index: 3, kind: input, shape index: {}]
  %s4 = inlined_call_operand.vmem [shape: f32[1,128], index: 4, kind: input, shape index: {}]
  %s5 = inlined_call_operand.hbm [shape: bf16[256,512], index: 5, kind: input, shape index: {}]
  %s6 = inlined_call_operand.vmem [shape: f32[1,512], index: 6, kind: input, shape index: {}]
  %s7 = inlined_call_operand.hbm [shape: bf16[128,128], index: 7, kind: input, shape index: {}]
  %s8 = inlined_call_operand.vmem [shape: f32[1,128], index: 8, kind: input, shape index: {}]
  %s9 = inlined_call_operand.hbm [shape: f32[1,128], index: 9, kind: output, shape index: {0}]
  %s10 = inlined_call_operand.hbm [shape: f32[2,128], index: 10, kind: output, shape index: {1}]
  %11 = xla_tuple %s9, %s10
  %s12 = sld [smem:[#allocation0]]
  $region70: #{tpu_custom_call.1} parent=0
    _
  %s14 = ssub.s32 1, %s12
  %s15 = scalar_select 0, %s14, %s12
  $region1: #{tpu_custom_call.1} parent=0
    #allocation2 [shape = 'u8[512]{0}', space=vmem, size = 0x400, scoped, tag = 'input window, operand 0, single buffered']
    #allocation3 [shape = 's32[1]{0}', space=sflag, size = 0x4, scoped, tag = 'scoped memory for tpu_custom_call.1']
    #allocation4 [shape = 's32[1]{0}', space=sflag, size = 0x4, scoped, tag = 'scoped memory for tpu_custom_call.1']
    #allocation5 [shape = 'u8[32768]{0}', space=vmem, size = 0x8000, scoped, tag = 'input window, operand 3, single buffered']
    #allocation6 [shape = 's32[1]{0}', space=sflag, size = 0x4, scoped, tag = 'scoped memory for tpu_custom_call.1']
    #allocation7 [shape = 'u8[262144]{0}', space=vmem, size = 0x40000, scoped, tag = 'input window, operand 5, single buffered']
    #allocation8 [shape = 'u8[32768]{0}', space=vmem, size = 0x8000, scoped, tag = 'input window, operand 7, single buffered']
    #allocation9 [shape = 's32[1]{0}', space=sflag, size = 0x4, scoped, tag = 'scoped memory for tpu_custom_call.1']
    #allocation10 [shape = 'u8[512]{0}', space=vmem, size = 0x400, scoped, tag = 'output window, operand 0, single buffered']
    #allocation11 [shape = 'u8[1024]{0}', space=vmem, size = 0x400, scoped, tag = 'output window, operand 1, single buffered']
    #allocation12 [shape = 's32[1]{0}', space=sflag, size = 0x4, scoped, tag = 'scoped memory for tpu_custom_call.1']
    %16 = vsyncpa [#allocation3], 0
    %17 = vsyncpa [#allocation6], 0
    %18 = vsyncpa [#allocation9], 0
    %19 = vsyncpa [#allocation4], 0
    %20 = vsyncpa [#allocation12], 0
    // Predicated region
    $region2: #{tpu_custom_call.1} parent=1 // pred_check
      _
    $region3: #{tpu_custom_call.1} parent=1 // pred_check_branch
      %22 = sbr.rel (0) target = $region5
    $region4: #{tpu_custom_call.1} parent=1 // pred_region
      %s24 = ssub.s32 16, 16
      %25 = vsyncadd [#allocation3], %s24
      %s27 = sshll.u32 [#allocation2], 4
      %s28 = int_to_ptr.vmem [resolvable:$true] %s27
      %30 = dma.hbm_to_vmem [thread:$0]  %s0, 16, %s28, [#allocation3]
    $region5: #{tpu_custom_call.1} parent=1 // pred_fallthru
      _
    // Predicated region
    $region6: #{tpu_custom_call.1} parent=1 // pred_check
      _
    $region7: #{tpu_custom_call.1} parent=1 // pred_check_branch
      %32 = sbr.rel (0) target = $region9
    $region8: #{tpu_custom_call.1} parent=1 // pred_region
      _
    $region9: #{tpu_custom_call.1} parent=1 // pred_fallthru
      _
    // Predicated region
    $region10: #{tpu_custom_call.1} parent=1 // pred_check
      _
    $region11: #{tpu_custom_call.1} parent=1 // pred_check_branch
      %34 = sbr.rel (0) target = $region13
    $region12: #{tpu_custom_call.1} parent=1 // pred_region
      _
    $region13: #{tpu_custom_call.1} parent=1 // pred_fallthru
      _
    // Predicated region
    $region14: #{tpu_custom_call.1} parent=1 // pred_check
      _
    $region15: #{tpu_custom_call.1} parent=1 // pred_check_branch
      %36 = sbr.rel (0) target = $region17
    $region16: #{tpu_custom_call.1} parent=1 // pred_region
      %s38 = ssub.s32 1024, 1024
      %39 = vsyncadd [#allocation6], %s38
      %s40 = sshll.u32 [#allocation5], 4
      %s41 = int_to_ptr.vmem [resolvable:$true] %s40
      %46 = dma.hbm_to_vmem [thread:$0]  %s3, 1024, %s41, [#allocation6], 64, 64, 4
    $region17: #{tpu_custom_call.1} parent=1 // pred_fallthru
      _
    // Predicated region
    $region18: #{tpu_custom_call.1} parent=1 // pred_check
      _
    $region19: #{tpu_custom_call.1} parent=1 // pred_check_branch
      %48 = sbr.rel (0) target = $region21
    $region20: #{tpu_custom_call.1} parent=1 // pred_region
      _
    $region21: #{tpu_custom_call.1} parent=1 // pred_fallthru
      _
    // Predicated region
    $region22: #{tpu_custom_call.1} parent=1 // pred_check
      _
    $region23: #{tpu_custom_call.1} parent=1 // pred_check_branch
      %50 = sbr.rel (0) target = $region25
    $region24: #{tpu_custom_call.1} parent=1 // pred_region
      %s52 = ssub.s32 8192, 8192
      %53 = vsyncadd [#allocation6], %s52
      %s54 = sshll.u32 [#allocation7], 4
      %s55 = int_to_ptr.vmem [resolvable:$true] %s54
      %60 = dma.hbm_to_vmem [thread:$0]  %s5, 8192, %s55, [#allocation6], 256, 256, 16
    $region25: #{tpu_custom_call.1} parent=1 // pred_fallthru
      _
    // Predicated region
    $region26: #{tpu_custom_call.1} parent=1 // pred_check
      _
    $region27: #{tpu_custom_call.1} parent=1 // pred_check_branch
      %62 = sbr.rel (0) target = $region29
    $region28: #{tpu_custom_call.1} parent=1 // pred_region
      _
    $region29: #{tpu_custom_call.1} parent=1 // pred_fallthru
      _
    // Predicated region
    $region30: #{tpu_custom_call.1} parent=1 // pred_check
      _
    $region31: #{tpu_custom_call.1} parent=1 // pred_check_branch
      %64 = sbr.rel (0) target = $region33
    $region32: #{tpu_custom_call.1} parent=1 // pred_region
      %s66 = ssub.s32 1024, 1024
      %67 = vsyncadd [#allocation9], %s66
      %s68 = sshll.u32 [#allocation8], 4
      %s69 = int_to_ptr.vmem [resolvable:$true] %s68
      %74 = dma.hbm_to_vmem [thread:$0]  %s7, 1024, %s69, [#allocation9], 64, 64, 4
    $region33: #{tpu_custom_call.1} parent=1 // pred_fallthru
      _
    // Predicated region
    $region34: #{tpu_custom_call.1} parent=1 // pred_check
      _
    $region35: #{tpu_custom_call.1} parent=1 // pred_check_branch
      %76 = sbr.rel (0) target = $region37
    $region36: #{tpu_custom_call.1} parent=1 // pred_region
      _
    $region37: #{tpu_custom_call.1} parent=1 // pred_fallthru
      _
    // Predicated region
    $region38: #{tpu_custom_call.1} parent=1 // pred_check
      _
    $region39: #{tpu_custom_call.1} parent=1 // pred_check_branch
      %78 = sbr.rel (0) target = $region41
    $region40: #{tpu_custom_call.1} parent=1 // pred_region
      %79 = dma.done [#allocation3], 16
    $region41: #{tpu_custom_call.1} parent=1 // pred_fallthru
      _
    // Predicated region
    $region42: #{tpu_custom_call.1} parent=1 // pred_check
      _
    $region43: #{tpu_custom_call.1} parent=1 // pred_check_branch
      %81 = sbr.rel (0) target = $region45
    $region44: #{tpu_custom_call.1} parent=1 // pred_region
      %82 = dma.done [#allocation6], 1024
    $region45: #{tpu_custom_call.1} parent=1 // pred_fallthru
      _
    // Predicated region
    $region46: #{tpu_custom_call.1} parent=1 // pred_check
      _
    $region47: #{tpu_custom_call.1} parent=1 // pred_check_branch
      %84 = sbr.rel (0) target = $region49
    $region48: #{tpu_custom_call.1} parent=1 // pred_region
      %85 = dma.done [#allocation6], 8192
    $region49: #{tpu_custom_call.1} parent=1 // pred_fallthru
      _
    // Predicated region
    $region50: #{tpu_custom_call.1} parent=1 // pred_check
      _
    $region51: #{tpu_custom_call.1} parent=1 // pred_check_branch
      %87 = sbr.rel (0) target = $region53
    $region52: #{tpu_custom_call.1} parent=1 // pred_region
      %88 = dma.done [#allocation9], 1024
    $region53: #{tpu_custom_call.1} parent=1 // pred_fallthru
      _
    %v90 = vld [vmem:[#allocation2] sm:$0x1]
    %v91 = vld [vmem:[#allocation5] sm:$0xf]
    %v92 = vld [vmem:[#allocation5 + $0x4] sm:$0xf]
    %v93 = vld [vmem:[#allocation5 + $0x8] sm:$0xf]
    %v94 = vld [vmem:[#allocation5 + $0xc] sm:$0xf]
    %v95 = vld [vmem:[#allocation5 + $0x10] sm:$0xf]
    %v96 = vld [vmem:[#allocation5 + $0x14] sm:$0xf]
    %v97 = vld [vmem:[#allocation5 + $0x18] sm:$0xf]
    %v98 = vld [vmem:[#allocation5 + $0x1c] sm:$0xf]
    %v99 = vld [vmem:[#allocation5 + $0x20] sm:$0xf]
    %v100 = vld [vmem:[#allocation5 + $0x24] sm:$0xf]
    %v101 = vld [vmem:[#allocation5 + $0x28] sm:$0xf]
    %v102 = vld [vmem:[#allocation5 + $0x2c] sm:$0xf]
    %v103 = vld [vmem:[#allocation5 + $0x30] sm:$0xf]
    %v104 = vld [vmem:[#allocation5 + $0x34] sm:$0xf]
    %v105 = vld [vmem:[#allocation5 + $0x38] sm:$0xf]
    %v106 = vld [vmem:[#allocation5 + $0x3c] sm:$0xf]
    %v107 = vld [vmem:[%s4] sm:$0x1]
    %v124 = vunpack.c.l.b16 %v91
    %v125 = vunpack.c.l.b16 %v92
    %v126 = vunpack.c.l.b16 %v93
    %v127 = vunpack.c.l.b16 %v94
    %v128 = vunpack.c.l.b16 %v95
    %v129 = vunpack.c.l.b16 %v96
    %v130 = vunpack.c.l.b16 %v97
    %v131 = vunpack.c.l.b16 %v98
    %v132 = vunpack.c.l.b16 %v99
    %v133 = vunpack.c.l.b16 %v100
    %v134 = vunpack.c.l.b16 %v101
    %v135 = vunpack.c.l.b16 %v102
    %v136 = vunpack.c.l.b16 %v103
    %v137 = vunpack.c.l.b16 %v104
    %v138 = vunpack.c.l.b16 %v105
    %v139 = vunpack.c.l.b16 %v106
    %v140 = vpack.c.b16 %v125, %v124
    %v141 = vpack.c.b16 %v127, %v126
    %v142 = vpack.c.b16 %v129, %v128
    %v143 = vpack.c.b16 %v131, %v130
    %v144 = vpack.c.b16 %v133, %v132
    %v145 = vpack.c.b16 %v135, %v134
    %v146 = vpack.c.b16 %v137, %v136
    %v147 = vpack.c.b16 %v139, %v138
    %156 = vmatprep.subr.bf16.mxu0 0
    %157 = vmatpush1.bf16.msra.mxu0 %v140
    %158 = vmatprep.subr.bf16.mxu0 0
    %159 = vmatpush1.bf16.msra.mxu0 %v141
    %160 = vmatprep.subr.bf16.mxu0 0
    %161 = vmatpush1.bf16.msra.mxu0 %v142
    %162 = vmatprep.subr.bf16.mxu0 0
    %163 = vmatpush1.bf16.msra.mxu0 %v143
    %164 = vmatprep.subr.bf16.mxu0 0
    %165 = vmatpush1.bf16.msra.mxu0 %v144
    %166 = vmatprep.subr.bf16.mxu0 0
    %167 = vmatpush1.bf16.msra.mxu0 %v145
    %168 = vmatprep.subr.bf16.mxu0 0
    %169 = vmatpush1.bf16.msra.mxu0 %v146
    %170 = vmatprep.subr.bf16.mxu0 0
    %171 = vmatpush1.bf16.msra.mxu0 %v147
    %172 = vmatprep.subr.bf16.mxu0 0
    %173 = vmatpush1.bf16.msra.mxu0 0
    %174 = vmatprep.subr.bf16.mxu0 0
    %175 = vmatpush1.bf16.msra.mxu0 0
    %176 = vmatprep.subr.bf16.mxu0 0
    %177 = vmatpush1.bf16.msra.mxu0 0
    %178 = vmatprep.subr.bf16.mxu0 0
    %179 = vmatpush1.bf16.msra.mxu0 0
    %180 = vmatprep.subr.bf16.mxu0 0
    %181 = vmatpush1.bf16.msra.mxu0 0
    %182 = vmatprep.subr.bf16.mxu0 0
    %183 = vmatpush1.bf16.msra.mxu0 0
    %184 = vmatprep.subr.bf16.mxu0 0
    %185 = vmatpush1.bf16.msra.mxu0 0
    %186 = vmatprep.subr.bf16.mxu0 0
    %187 = vmatpush1.bf16.msra.mxu0 0
    %188 = vmatprep.mubr.bf16.mxu0 0
    %189 = vmatmul.mubr.bf16.gmra.mrb[0].mxu0 %v90
    %v190 = vpop.f32.mrb[0].mxu0
    %v191 = vadd.f32 %v107, %v190
    %v192 = vpop.f32.mrb[0].mxu0
    %v193 = vpop.f32.mrb[0].mxu0
    %v194 = vpop.f32.mrb[0].mxu0
    %195 = vdwg.mxu0
    %v196 = vmax.f32 %v191, 0.0
    %v197 = vpack.c.bf16 %v196, %v196
    %v198 = vld [vmem:[%s1] sm:$0x1]
    %v199 = vld [vmem:[#allocation7] sm:$0xff]
    %v200 = vld [vmem:[#allocation7 + $0x8] sm:$0xff]
    %v201 = vld [vmem:[#allocation7 + $0x10] sm:$0xff]
    %v202 = vld [vmem:[#allocation7 + $0x18] sm:$0xff]
    %v203 = vld [vmem:[#allocation7 + $0x20] sm:$0xff]
    %v204 = vld [vmem:[#allocation7 + $0x28] sm:$0xff]
    %v205 = vld [vmem:[#allocation7 + $0x30] sm:$0xff]
    %v206 = vld [vmem:[#allocation7 + $0x38] sm:$0xff]
    %v207 = vld [vmem:[#allocation7 + $0x40] sm:$0xff]
    %v208 = vld [vmem:[#allocation7 + $0x48] sm:$0xff]
    %v209 = vld [vmem:[#allocation7 + $0x50] sm:$0xff]
    %v210 = vld [vmem:[#allocation7 + $0x58] sm:$0xff]
    %v211 = vld [vmem:[#allocation7 + $0x60] sm:$0xff]
    %v212 = vld [vmem:[#allocation7 + $0x68] sm:$0xff]
    %v213 = vld [vmem:[#allocation7 + $0x70] sm:$0xff]
    %v214 = vld [vmem:[#allocation7 + $0x78] sm:$0xff]
    %v215 = vld [vmem:[#allocation7 + $0x80] sm:$0xff]
    %v216 = vld [vmem:[#allocation7 + $0x88] sm:$0xff]
    %v217 = vld [vmem:[#allocation7 + $0x90] sm:$0xff]
    %v218 = vld [vmem:[#allocation7 + $0x98] sm:$0xff]
    %v219 = vld [vmem:[#allocation7 + $0xa0] sm:$0xff]
    %v220 = vld [vmem:[#allocation7 + $0xa8] sm:$0xff]
    %v221 = vld [vmem:[#allocation7 + $0xb0] sm:$0xff]
    %v222 = vld [vmem:[#allocation7 + $0xb8] sm:$0xff]
    %v223 = vld [vmem:[#allocation7 + $0xc0] sm:$0xff]
    %v224 = vld [vmem:[#allocation7 + $0xc8] sm:$0xff]
    %v225 = vld [vmem:[#allocation7 + $0xd0] sm:$0xff]
    %v226 = vld [vmem:[#allocation7 + $0xd8] sm:$0xff]
    %v227 = vld [vmem:[#allocation7 + $0xe0] sm:$0xff]
    %v228 = vld [vmem:[#allocation7 + $0xe8] sm:$0xff]
    %v229 = vld [vmem:[#allocation7 + $0xf0] sm:$0xff]
    %v230 = vld [vmem:[#allocation7 + $0xf8] sm:$0xff]
    %v231 = vld [vmem:[#allocation7 + $0x100] sm:$0xff]
    %v232 = vld [vmem:[#allocation7 + $0x108] sm:$0xff]
    %v233 = vld [vmem:[#allocation7 + $0x110] sm:$0xff]
    %v234 = vld [vmem:[#allocation7 + $0x118] sm:$0xff]
    %v235 = vld [vmem:[#allocation7 + $0x120] sm:$0xff]
    %v236 = vld [vmem:[#allocation7 + $0x128] sm:$0xff]
    %v237 = vld [vmem:[#allocation7 + $0x130] sm:$0xff]
    %v238 = vld [vmem:[#allocation7 + $0x138] sm:$0xff]
    %v239 = vld [vmem:[#allocation7 + $0x140] sm:$0xff]
    %v240 = vld [vmem:[#allocation7 + $0x148] sm:$0xff]
    %v241 = vld [vmem:[#allocation7 + $0x150] sm:$0xff]
    %v242 = vld [vmem:[#allocation7 + $0x158] sm:$0xff]
    %v243 = vld [vmem:[#allocation7 + $0x160] sm:$0xff]
    %v244 = vld [vmem:[#allocation7 + $0x168] sm:$0xff]
    %v245 = vld [vmem:[#allocation7 + $0x170] sm:$0xff]
    %v246 = vld [vmem:[#allocation7 + $0x178] sm:$0xff]
    %v247 = vld [vmem:[#allocation7 + $0x180] sm:$0xff]
    %v248 = vld [vmem:[#allocation7 + $0x188] sm:$0xff]
    %v249 = vld [vmem:[#allocation7 + $0x190] sm:$0xff]
    %v250 = vld [vmem:[#allocation7 + $0x198] sm:$0xff]
    %v251 = vld [vmem:[#allocation7 + $0x1a0] sm:$0xff]
    %v252 = vld [vmem:[#allocation7 + $0x1a8] sm:$0xff]
    %v253 = vld [vmem:[#allocation7 + $0x1b0] sm:$0xff]
    %v254 = vld [vmem:[#allocation7 + $0x1b8] sm:$0xff]
    %v255 = vld [vmem:[#allocation7 + $0x1c0] sm:$0xff]
    %v256 = vld [vmem:[#allocation7 + $0x1c8] sm:$0xff]
    %v257 = vld [vmem:[#allocation7 + $0x1d0] sm:$0xff]
    %v258 = vld [vmem:[#allocation7 + $0x1d8] sm:$0xff]
    %v259 = vld [vmem:[#allocation7 + $0x1e0] sm:$0xff]
    %v260 = vld [vmem:[#allocation7 + $0x1e8] sm:$0xff]
    %v261 = vld [vmem:[#allocation7 + $0x1f0] sm:$0xff]
    %v262 = vld [vmem:[#allocation7 + $0x1f8] sm:$0xff]
    %v263 = vld [vmem:[%s6] sm:$0xf]
    %v328 = vunpack.c.l.b16 %v199
    %v329 = vunpack.c.h.b16 %v199
    %v330 = vunpack.c.l.b16 %v200
    %v331 = vunpack.c.h.b16 %v200
    %v332 = vunpack.c.l.b16 %v201
    %v333 = vunpack.c.h.b16 %v201
    %v334 = vunpack.c.l.b16 %v202
    %v335 = vunpack.c.h.b16 %v202
    %v336 = vunpack.c.l.b16 %v203
    %v337 = vunpack.c.h.b16 %v203
    %v338 = vunpack.c.l.b16 %v204
    %v339 = vunpack.c.h.b16 %v204
    %v340 = vunpack.c.l.b16 %v205
    %v341 = vunpack.c.h.b16 %v205
    %v342 = vunpack.c.l.b16 %v206
    %v343 = vunpack.c.h.b16 %v206
    %v344 = vunpack.c.l.b16 %v207
    %v345 = vunpack.c.h.b16 %v207
    %v346 = vunpack.c.l.b16 %v208
    %v347 = vunpack.c.h.b16 %v208
    %v348 = vunpack.c.l.b16 %v209
    %v349 = vunpack.c.h.b16 %v209
    %v350 = vunpack.c.l.b16 %v210
    %v351 = vunpack.c.h.b16 %v210
    %v352 = vunpack.c.l.b16 %v211
    %v353 = vunpack.c.h.b16 %v211
    %v354 = vunpack.c.l.b16 %v212
    %v355 = vunpack.c.h.b16 %v212
    %v356 = vunpack.c.l.b16 %v213
    %v357 = vunpack.c.h.b16 %v213
    %v358 = vunpack.c.l.b16 %v214
    %v359 = vunpack.c.h.b16 %v214
    %v360 = vunpack.c.l.b16 %v215
    %v361 = vunpack.c.h.b16 %v215
    %v362 = vunpack.c.l.b16 %v216
    %v363 = vunpack.c.h.b16 %v216
    %v364 = vunpack.c.l.b16 %v217
    %v365 = vunpack.c.h.b16 %v217
    %v366 = vunpack.c.l.b16 %v218
    %v367 = vunpack.c.h.b16 %v218
    %v368 = vunpack.c.l.b16 %v219
    %v369 = vunpack.c.h.b16 %v219
    %v370 = vunpack.c.l.b16 %v220
    %v371 = vunpack.c.h.b16 %v220
    %v372 = vunpack.c.l.b16 %v221
    %v373 = vunpack.c.h.b16 %v221
    %v374 = vunpack.c.l.b16 %v222
    %v375 = vunpack.c.h.b16 %v222
    %v376 = vunpack.c.l.b16 %v223
    %v377 = vunpack.c.h.b16 %v223
    %v378 = vunpack.c.l.b16 %v224
    %v379 = vunpack.c.h.b16 %v224
    %v380 = vunpack.c.l.b16 %v225
    %v381 = vunpack.c.h.b16 %v225
    %v382 = vunpack.c.l.b16 %v226
    %v383 = vunpack.c.h.b16 %v226
    %v384 = vunpack.c.l.b16 %v227
    %v385 = vunpack.c.h.b16 %v227
    %v386 = vunpack.c.l.b16 %v228
    %v387 = vunpack.c.h.b16 %v228
    %v388 = vunpack.c.l.b16 %v229
    %v389 = vunpack.c.h.b16 %v229
    %v390 = vunpack.c.l.b16 %v230
    %v391 = vunpack.c.h.b16 %v230
    %v392 = vunpack.c.l.b16 %v231
    %v393 = vunpack.c.h.b16 %v231
    %v394 = vunpack.c.l.b16 %v232
    %v395 = vunpack.c.h.b16 %v232
    %v396 = vunpack.c.l.b16 %v233
    %v397 = vunpack.c.h.b16 %v233
    %v398 = vunpack.c.l.b16 %v234
    %v399 = vunpack.c.h.b16 %v234
    %v400 = vunpack.c.l.b16 %v235
    %v401 = vunpack.c.h.b16 %v235
    %v402 = vunpack.c.l.b16 %v236
    %v403 = vunpack.c.h.b16 %v236
    %v404 = vunpack.c.l.b16 %v237
    %v405 = vunpack.c.h.b16 %v237
    %v406 = vunpack.c.l.b16 %v238
    %v407 = vunpack.c.h.b16 %v238
    %v408 = vunpack.c.l.b16 %v239
    %v409 = vunpack.c.h.b16 %v239
    %v410 = vunpack.c.l.b16 %v240
    %v411 = vunpack.c.h.b16 %v240
    %v412 = vunpack.c.l.b16 %v241
    %v413 = vunpack.c.h.b16 %v241
    %v414 = vunpack.c.l.b16 %v242
    %v415 = vunpack.c.h.b16 %v242
    %v416 = vunpack.c.l.b16 %v243
    %v417 = vunpack.c.h.b16 %v243
    %v418 = vunpack.c.l.b16 %v244
    %v419 = vunpack.c.h.b16 %v244
    %v420 = vunpack.c.l.b16 %v245
    %v421 = vunpack.c.h.b16 %v245
    %v422 = vunpack.c.l.b16 %v246
    %v423 = vunpack.c.h.b16 %v246
    %v424 = vunpack.c.l.b16 %v247
    %v425 = vunpack.c.h.b16 %v247
    %v426 = vunpack.c.l.b16 %v248
    %v427 = vunpack.c.h.b16 %v248
    %v428 = vunpack.c.l.b16 %v249
    %v429 = vunpack.c.h.b16 %v249
    %v430 = vunpack.c.l.b16 %v250
    %v431 = vunpack.c.h.b16 %v250
    %v432 = vunpack.c.l.b16 %v251
    %v433 = vunpack.c.h.b16 %v251
    %v434 = vunpack.c.l.b16 %v252
    %v435 = vunpack.c.h.b16 %v252
    %v436 = vunpack.c.l.b16 %v253
    %v437 = vunpack.c.h.b16 %v253
    %v438 = vunpack.c.l.b16 %v254
    %v439 = vunpack.c.h.b16 %v254
    %v440 = vunpack.c.l.b16 %v255
    %v441 = vunpack.c.h.b16 %v255
    %v442 = vunpack.c.l.b16 %v256
    %v443 = vunpack.c.h.b16 %v256
    %v444 = vunpack.c.l.b16 %v257
    %v445 = vunpack.c.h.b16 %v257
    %v446 = vunpack.c.l.b16 %v258
    %v447 = vunpack.c.h.b16 %v258
    %v448 = vunpack.c.l.b16 %v259
    %v449 = vunpack.c.h.b16 %v259
    %v450 = vunpack.c.l.b16 %v260
    %v451 = vunpack.c.h.b16 %v260
    %v452 = vunpack.c.l.b16 %v261
    %v453 = vunpack.c.h.b16 %v261
    %v454 = vunpack.c.l.b16 %v262
    %v455 = vunpack.c.h.b16 %v262
    %v456 = vpack.c.b16 %v332, %v328
    %v457 = vpack.c.b16 %v333, %v329
    %v458 = vpack.c.b16 %v334, %v330
    %v459 = vpack.c.b16 %v335, %v331
    %v460 = vpack.c.b16 %v340, %v336
    %v461 = vpack.c.b16 %v341, %v337
    %v462 = vpack.c.b16 %v342, %v338
    %v463 = vpack.c.b16 %v343, %v339
    %v464 = vpack.c.b16 %v348, %v344
    %v465 = vpack.c.b16 %v349, %v345
    %v466 = vpack.c.b16 %v350, %v346
    %v467 = vpack.c.b16 %v351, %v347
    %v468 = vpack.c.b16 %v356, %v352
    %v469 = vpack.c.b16 %v357, %v353
    %v470 = vpack.c.b16 %v358, %v354
    %v471 = vpack.c.b16 %v359, %v355
    %v472 = vpack.c.b16 %v364, %v360
    %v473 = vpack.c.b16 %v365, %v361
    %v474 = vpack.c.b16 %v366, %v362
    %v475 = vpack.c.b16 %v367, %v363
    %v476 = vpack.c.b16 %v372, %v368
    %v477 = vpack.c.b16 %v373, %v369
    %v478 = vpack.c.b16 %v374, %v370
    %v479 = vpack.c.b16 %v375, %v371
    %v480 = vpack.c.b16 %v380, %v376
    %v481 = vpack.c.b16 %v381, %v377
    %v482 = vpack.c.b16 %v382, %v378
    %v483 = vpack.c.b16 %v383, %v379
    %v484 = vpack.c.b16 %v388, %v384
    %v485 = vpack.c.b16 %v389, %v385
    %v486 = vpack.c.b16 %v390, %v386
    %v487 = vpack.c.b16 %v391, %v387
    %v488 = vpack.c.b16 %v396, %v392
    %v489 = vpack.c.b16 %v397, %v393
    %v490 = vpack.c.b16 %v398, %v394
    %v491 = vpack.c.b16 %v399, %v395
    %v492 = vpack.c.b16 %v404, %v400
    %v493 = vpack.c.b16 %v405, %v401
    %v494 = vpack.c.b16 %v406, %v402
    %v495 = vpack.c.b16 %v407, %v403
    %v496 = vpack.c.b16 %v412, %v408
    %v497 = vpack.c.b16 %v413, %v409
    %v498 = vpack.c.b16 %v414, %v410
    %v499 = vpack.c.b16 %v415, %v411
    %v500 = vpack.c.b16 %v420, %v416
    %v501 = vpack.c.b16 %v421, %v417
    %v502 = vpack.c.b16 %v422, %v418
    %v503 = vpack.c.b16 %v423, %v419
    %v504 = vpack.c.b16 %v428, %v424
    %v505 = vpack.c.b16 %v429, %v425
    %v506 = vpack.c.b16 %v430, %v426
    %v507 = vpack.c.b16 %v431, %v427
    %v508 = vpack.c.b16 %v436, %v432
    %v509 = vpack.c.b16 %v437, %v433
    %v510 = vpack.c.b16 %v438, %v434
    %v511 = vpack.c.b16 %v439, %v435
    %v512 = vpack.c.b16 %v444, %v440
    %v513 = vpack.c.b16 %v445, %v441
    %v514 = vpack.c.b16 %v446, %v442
    %v515 = vpack.c.b16 %v447, %v443
    %v516 = vpack.c.b16 %v452, %v448
    %v517 = vpack.c.b16 %v453, %v449
    %v518 = vpack.c.b16 %v454, %v450
    %v519 = vpack.c.b16 %v455, %v451
    %v585 = vlaneseq
    %v586 = vshrl.u32 %v585, 7
    %v587 = vsub.s32 0, %v586
    %v588 = vrot.slane %v263, %v587
    %v589 = vlaneseq
    %v590 = vshrl.u32 %v589, 7
    %v591 = vsub.s32 1, %v590
    %v592 = vrot.slane %v263, %v591
    %v593 = vlaneseq
    %v594 = vshrl.u32 %v593, 7
    %v595 = vsub.s32 2, %v594
    %v596 = vrot.slane %v263, %v595
    %v597 = vlaneseq
    %v598 = vshrl.u32 %v597, 7
    %v599 = vsub.s32 3, %v598
    %v600 = vrot.slane %v263, %v599
    %605 = vmatprep.subr.bf16.mxu0 %v457
    %606 = vmatpush1.bf16.msra.mxu0 %v456
    %607 = vmatprep.subr.bf16.mxu0 %v461
    %608 = vmatpush1.bf16.msra.mxu0 %v460
    %609 = vmatprep.subr.bf16.mxu0 %v465
    %610 = vmatpush1.bf16.msra.mxu0 %v464
    %611 = vmatprep.subr.bf16.mxu0 %v469
    %612 = vmatpush1.bf16.msra.mxu0 %v468
    %613 = vmatprep.subr.bf16.mxu0 %v473
    %614 = vmatpush1.bf16.msra.mxu0 %v472
    %615 = vmatprep.subr.bf16.mxu0 %v477
    %616 = vmatpush1.bf16.msra.mxu0 %v476
    %617 = vmatprep.subr.bf16.mxu0 %v481
    %618 = vmatpush1.bf16.msra.mxu0 %v480
    %619 = vmatprep.subr.bf16.mxu0 %v485
    %620 = vmatpush1.bf16.msra.mxu0 %v484
    %621 = vmatprep.subr.bf16.mxu0 %v489
    %622 = vmatpush1.bf16.msra.mxu0 %v488
    %623 = vmatprep.subr.bf16.mxu0 %v493
    %624 = vmatpush1.bf16.msra.mxu0 %v492
    %625 = vmatprep.subr.bf16.mxu0 %v497
    %626 = vmatpush1.bf16.msra.mxu0 %v496
    %627 = vmatprep.subr.bf16.mxu0 %v501
    %628 = vmatpush1.bf16.msra.mxu0 %v500
    %629 = vmatprep.subr.bf16.mxu0 %v505
    %630 = vmatpush1.bf16.msra.mxu0 %v504
    %631 = vmatprep.subr.bf16.mxu0 %v509
    %632 = vmatpush1.bf16.msra.mxu0 %v508
    %633 = vmatprep.subr.bf16.mxu0 %v513
    %634 = vmatpush1.bf16.msra.mxu0 %v512
    %635 = vmatprep.subr.bf16.mxu0 %v517
    %636 = vmatpush1.bf16.msra.mxu0 %v516
    %637 = vmatprep.mubr.bf16.mxu0 %v198
    %638 = vmatmul.mubr.bf16.gmra.mrb[0].mxu0 %v197
    %v639 = vpop.f32.mrb[0].mxu0
    %v640 = vadd.f32 %v588, %v639
    %v641 = vpop.f32.mrb[0].mxu0
    %v642 = vadd.f32 %v592, %v641
    %v643 = vpop.f32.mrb[0].mxu0
    %v644 = vpop.f32.mrb[0].mxu0
    %645 = vdwg.mxu0
    %646 = vmatprep.subr.bf16.mxu0 %v459
    %647 = vmatpush1.bf16.msra.mxu0 %v458
    %648 = vmatprep.subr.bf16.mxu0 %v463
    %649 = vmatpush1.bf16.msra.mxu0 %v462
    %650 = vmatprep.subr.bf16.mxu0 %v467
    %651 = vmatpush1.bf16.msra.mxu0 %v466
    %652 = vmatprep.subr.bf16.mxu0 %v471
    %653 = vmatpush1.bf16.msra.mxu0 %v470
    %654 = vmatprep.subr.bf16.mxu0 %v475
    %655 = vmatpush1.bf16.msra.mxu0 %v474
    %656 = vmatprep.subr.bf16.mxu0 %v479
    %657 = vmatpush1.bf16.msra.mxu0 %v478
    %658 = vmatprep.subr.bf16.mxu0 %v483
    %659 = vmatpush1.bf16.msra.mxu0 %v482
    %660 = vmatprep.subr.bf16.mxu0 %v487
    %661 = vmatpush1.bf16.msra.mxu0 %v486
    %662 = vmatprep.subr.bf16.mxu0 %v491
    %663 = vmatpush1.bf16.msra.mxu0 %v490
    %664 = vmatprep.subr.bf16.mxu0 %v495
    %665 = vmatpush1.bf16.msra.mxu0 %v494
    %666 = vmatprep.subr.bf16.mxu0 %v499
    %667 = vmatpush1.bf16.msra.mxu0 %v498
    %668 = vmatprep.subr.bf16.mxu0 %v503
    %669 = vmatpush1.bf16.msra.mxu0 %v502
    %670 = vmatprep.subr.bf16.mxu0 %v507
    %671 = vmatpush1.bf16.msra.mxu0 %v506
    %672 = vmatprep.subr.bf16.mxu0 %v511
    %673 = vmatpush1.bf16.msra.mxu0 %v510
    %674 = vmatprep.subr.bf16.mxu0 %v515
    %675 = vmatpush1.bf16.msra.mxu0 %v514
    %676 = vmatprep.subr.bf16.mxu0 %v519
    %677 = vmatpush1.bf16.msra.mxu0 %v518
    %678 = vmatprep.mubr.bf16.mxu0 %v198
    %679 = vmatmul.mubr.bf16.gmra.mrb[0].mxu0 %v197
    %v680 = vpop.f32.mrb[0].mxu0
    %v681 = vadd.f32 %v596, %v680
    %v682 = vpop.f32.mrb[0].mxu0
    %v683 = vadd.f32 %v600, %v682
    %v684 = vpop.f32.mrb[0].mxu0
    %v685 = vpop.f32.mrb[0].mxu0
    %686 = vdwg.mxu0
    %v687 = vxor.u32 %v640, 2147483648
    %v688 = vxor.u32 %v642, 2147483648
    %v689 = vxor.u32 %v683, 2147483648
    %v690 = vmul.f32 %v687, 1.442695
    %v691 = vpow.pop %v690
    %v692 = vmul.f32 %v688, 1.442695
    %v693 = vpow.pop %v692
    %v694 = vmul.f32 %v689, 1.442695
    %v695 = vpow.pop %v694
    %v696 = vadd.f32 %v691, 1.0
    %v697 = vadd.f32 %v693, 1.0
    %v698 = vadd.f32 %v695, 1.0
    %v699 = vrcp.pop %v696
    %v700 = vmul.f32 1.0, %v699
    %v701 = vrcp.pop %v697
    %v702 = vmul.f32 1.0, %v701
    %v703 = vrcp.pop %v698
    %v704 = vmul.f32 1.0, %v703
    %v705 = vtanh.pop %v681
    %v706 = vld [vmem:[%s2] sm:$0x1]
    %v707 = vmul.f32 %v702, %v706
    %v708 = vmul.f32 %v700, %v705
    %v709 = vadd.f32 %v707, %v708
    %v710 = vtanh.pop %v709
    %v711 = vmul.f32 %v704, %v710
    %v712 = vmax.f32 %v711, 0.0
    %v713 = vpack.c.bf16 %v712, %v712
    %v714 = vld [vmem:[#allocation8] sm:$0xf]
    %v715 = vld [vmem:[#allocation8 + $0x4] sm:$0xf]
    %v716 = vld [vmem:[#allocation8 + $0x8] sm:$0xf]
    %v717 = vld [vmem:[#allocation8 + $0xc] sm:$0xf]
    %v718 = vld [vmem:[#allocation8 + $0x10] sm:$0xf]
    %v719 = vld [vmem:[#allocation8 + $0x14] sm:$0xf]
    %v720 = vld [vmem:[#allocation8 + $0x18] sm:$0xf]
    %v721 = vld [vmem:[#allocation8 + $0x1c] sm:$0xf]
    %v722 = vld [vmem:[#allocation8 + $0x20] sm:$0xf]
    %v723 = vld [vmem:[#allocation8 + $0x24] sm:$0xf]
    %v724 = vld [vmem:[#allocation8 + $0x28] sm:$0xf]
    %v725 = vld [vmem:[#allocation8 + $0x2c] sm:$0xf]
    %v726 = vld [vmem:[#allocation8 + $0x30] sm:$0xf]
    %v727 = vld [vmem:[#allocation8 + $0x34] sm:$0xf]
    %v728 = vld [vmem:[#allocation8 + $0x38] sm:$0xf]
    %v729 = vld [vmem:[#allocation8 + $0x3c] sm:$0xf]
    %v730 = vld [vmem:[%s8] sm:$0x1]
    %v747 = vunpack.c.l.b16 %v714
    %v748 = vunpack.c.l.b16 %v715
    %v749 = vunpack.c.l.b16 %v716
    %v750 = vunpack.c.l.b16 %v717
    %v751 = vunpack.c.l.b16 %v718
    %v752 = vunpack.c.l.b16 %v719
    %v753 = vunpack.c.l.b16 %v720
    %v754 = vunpack.c.l.b16 %v721
    %v755 = vunpack.c.l.b16 %v722
    %v756 = vunpack.c.l.b16 %v723
    %v757 = vunpack.c.l.b16 %v724
    %v758 = vunpack.c.l.b16 %v725
    %v759 = vunpack.c.l.b16 %v726
    %v760 = vunpack.c.l.b16 %v727
    %v761 = vunpack.c.l.b16 %v728
    %v762 = vunpack.c.l.b16 %v729
    %v763 = vpack.c.b16 %v748, %v747
    %v764 = vpack.c.b16 %v750, %v749
    %v765 = vpack.c.b16 %v752, %v751
    %v766 = vpack.c.b16 %v754, %v753
    %v767 = vpack.c.b16 %v756, %v755
    %v768 = vpack.c.b16 %v758, %v757
    %v769 = vpack.c.b16 %v760, %v759
    %v770 = vpack.c.b16 %v762, %v761
    %779 = vmatprep.subr.bf16.mxu0 0
    %780 = vmatpush1.bf16.msra.mxu0 %v763
    %781 = vmatprep.subr.bf16.mxu0 0
    %782 = vmatpush1.bf16.msra.mxu0 %v764
    %783 = vmatprep.subr.bf16.mxu0 0
    %784 = vmatpush1.bf16.msra.mxu0 %v765
    %785 = vmatprep.subr.bf16.mxu0 0
    %786 = vmatpush1.bf16.msra.mxu0 %v766
    %787 = vmatprep.subr.bf16.mxu0 0
    %788 = vmatpush1.bf16.msra.mxu0 %v767
    %789 = vmatprep.subr.bf16.mxu0 0
    %790 = vmatpush1.bf16.msra.mxu0 %v768
    %791 = vmatprep.subr.bf16.mxu0 0
    %792 = vmatpush1.bf16.msra.mxu0 %v769
    %793 = vmatprep.subr.bf16.mxu0 0
    %794 = vmatpush1.bf16.msra.mxu0 %v770
    %795 = vmatprep.subr.bf16.mxu0 0
    %796 = vmatpush1.bf16.msra.mxu0 0
    %797 = vmatprep.subr.bf16.mxu0 0
    %798 = vmatpush1.bf16.msra.mxu0 0
    %799 = vmatprep.subr.bf16.mxu0 0
    %800 = vmatpush1.bf16.msra.mxu0 0
    %801 = vmatprep.subr.bf16.mxu0 0
    %802 = vmatpush1.bf16.msra.mxu0 0
    %803 = vmatprep.subr.bf16.mxu0 0
    %804 = vmatpush1.bf16.msra.mxu0 0
    %805 = vmatprep.subr.bf16.mxu0 0
    %806 = vmatpush1.bf16.msra.mxu0 0
    %807 = vmatprep.subr.bf16.mxu0 0
    %808 = vmatpush1.bf16.msra.mxu0 0
    %809 = vmatprep.subr.bf16.mxu0 0
    %810 = vmatpush1.bf16.msra.mxu0 0
    %811 = vmatprep.mubr.bf16.mxu0 0
    %812 = vmatmul.mubr.bf16.gmra.mrb[0].mxu0 %v713
    %v813 = vpop.f32.mrb[0].mxu0
    %v814 = vadd.f32 %v730, %v813
    %v815 = vpop.f32.mrb[0].mxu0
    %v816 = vpop.f32.mrb[0].mxu0
    %v817 = vpop.f32.mrb[0].mxu0
    %818 = vdwg.mxu0
    %819 = vst [vmem:[#allocation10] sm:$0x1] %v814
    %v821 = vrot.slane %v709, 7
    %vm823 = vcmask 1040384
    %v824 = vsel %vm823, %v711, %v821
    %825 = vst [vmem:[#allocation11] sm:$0x3] %v824
    // Predicated region
    $region54: #{tpu_custom_call.1} parent=1 // pred_check
      _
    $region55: #{tpu_custom_call.1} parent=1 // pred_check_branch
      %827 = sbr.rel (0) target = $region57
    $region56: #{tpu_custom_call.1} parent=1 // pred_region
      %s829 = ssub.s32 16, 16
      %830 = vsyncadd [#allocation4], %s829
      %s832 = sshll.u32 [#allocation10], 4
      %s833 = int_to_ptr.vmem [resolvable:$true] %s832
      %835 = dma.vmem_to_hbm [thread:$0]  %s833, 16, %s9, [#allocation4]
    $region57: #{tpu_custom_call.1} parent=1 // pred_fallthru
      _
    // Predicated region
    $region58: #{tpu_custom_call.1} parent=1 // pred_check
      _
    $region59: #{tpu_custom_call.1} parent=1 // pred_check_branch
      %837 = sbr.rel (0) target = $region61
    $region60: #{tpu_custom_call.1} parent=1 // pred_region
      %s839 = ssub.s32 32, 32
      %840 = vsyncadd [#allocation12], %s839
      %s842 = sshll.u32 [#allocation11], 4
      %s843 = int_to_ptr.vmem [resolvable:$true] %s842
      %845 = dma.vmem_to_hbm [thread:$0]  %s843, 32, %s10, [#allocation12]
    $region61: #{tpu_custom_call.1} parent=1 // pred_fallthru
      _
    // Predicated region
    $region62: #{tpu_custom_call.1} parent=1 // pred_check
      _
    $region63: #{tpu_custom_call.1} parent=1 // pred_check_branch
      %847 = sbr.rel (0) target = $region65
    $region64: #{tpu_custom_call.1} parent=1 // pred_region
      %848 = dma.done [#allocation4], 16
    $region65: #{tpu_custom_call.1} parent=1 // pred_fallthru
      _
    // Predicated region
    $region66: #{tpu_custom_call.1} parent=1 // pred_check
      _
    $region67: #{tpu_custom_call.1} parent=1 // pred_check_branch
      %850 = sbr.rel (0) target = $region69
    $region68: #{tpu_custom_call.1} parent=1 // pred_region
      %851 = dma.done [#allocation12], 32
    $region69: #{tpu_custom_call.1} parent=1 // pred_fallthru
      _
    %852 = vsyncpa [#allocation3], 1
    %853 = vsyncpa [#allocation6], 1
    %854 = vsyncpa [#allocation9], 1
    %855 = vsyncpa [#allocation4], 1
    %856 = vsyncpa [#allocation12], 1

</llo_original>
